<compile_context>
chip_gen: v6e
topology: v6e:2x2x1
jax: 0.10.0
libtpu: 0.0.40
codegen_flags: <defaults>
</compile_context>

<pallas_src>
import functools

import jax
import jax.numpy as jnp
from jax.experimental import pallas as pl
from jax.experimental.pallas import tpu as pltpu


def _csa_kernel(in_ref, tgt_ref, out_ref, acc_ref, *, num_pixels, tile_n):
    j = pl.program_id(0)

    @pl.when(j == 0)
    def _init():
        acc_ref[...] = jnp.zeros_like(acc_ref)

    x = in_ref[...].astype(jnp.float32)            # (B, TILE_N)
    t = tgt_ref[...].astype(jnp.float32)           # (B, TILE_N)

    # Per-column (band-axis) reductions.
    sum_x = jnp.sum(x, axis=0, keepdims=True)      # (1, TILE_N)
    sum_t = jnp.sum(t, axis=0, keepdims=True)      # (1, TILE_N)
    sum_xt = jnp.sum(x * t, axis=0, keepdims=True)  # (1, TILE_N)

    numer = sum_xt
    denom = sum_x * sum_t

    if num_pixels % tile_n != 0:
        # Ragged last tile: neutralize padded lanes (they contain garbage).
        # Static branch: only emitted when the shape actually needs it.
        col = j * tile_n + jax.lax.broadcasted_iota(jnp.int32, (1, tile_n), 1)
        valid = col < num_pixels
        numer = jnp.where(valid, numer, jnp.float32(0.0))
        denom = jnp.where(valid, denom, jnp.float32(1.0))

    # One N-wide divide per tile (vs. 2*B*N divides in the naive form).
    acc_ref[...] += numer / denom

    @pl.when(j == pl.num_programs(0) - 1)
    def _finalize():
        out_ref[0, 0] = jnp.float32(1.0) - jnp.sum(acc_ref[...])


def csa(input_arr: jax.Array, target_arr: jax.Array, *, tile_n: int = 2048) -> jax.Array:
    """Pallas-backed CSA forward. Returns a scalar float32."""
    assert input_arr.shape == target_arr.shape
    assert input_arr.ndim == 2, "kernel expects (num_bands, num_pixels)"
    num_bands, num_pixels = input_arr.shape

    if num_pixels <= tile_n:
        tn = num_pixels            # single full-width block (always legal)
    else:
        assert tile_n % 128 == 0, "tile_n must be a multiple of 128"
        tn = tile_n                # 2 inputs x 2 buffers x B*tn*4B stays small
    grid = (pl.cdiv(num_pixels, tn),)

    kernel = functools.partial(_csa_kernel, num_pixels=num_pixels, tile_n=tn)

    out = pl.pallas_call(
        kernel,
        out_shape=jax.ShapeDtypeStruct((1, 1), jnp.float32),
        grid_spec=pltpu.PrefetchScalarGridSpec(
            num_scalar_prefetch=0,
            grid=grid,
            in_specs=[
                pl.BlockSpec((num_bands, tn), lambda j: (0, j)),
                pl.BlockSpec((num_bands, tn), lambda j: (0, j)),
            ],
            out_specs=pl.BlockSpec(memory_space=pltpu.SMEM),
            scratch_shapes=[pltpu.VMEM((1, tn), jnp.float32)],
        ),
        compiler_params=pltpu.CompilerParams(
            dimension_semantics=("arbitrary",),    # pixel axis is a reduction
        ),
        # TODO(synk): on v7x, a leading 2-wide "parallel" axis with per-core
        # partials (summed in the wrapper) would let both TensorCores stream
        # HBM concurrently; kept single-core here for portability.
    )(input_arr, target_arr)
    return out[0, 0]


def _csa_ref(x, t):
    x = x.astype(jnp.float32)
    t = t.astype(jnp.float32)
    nr = x / jnp.sum(x, axis=0)
    nt = t / jnp.sum(t, axis=0)
    return 1.0 - jnp.sum(nr * nt)


if __name__ == "__main__":
    key = jax.random.PRNGKey(0)

    # Small shapes consistent with the module (bands x pixels). Second case
    # exercises the tiled / ragged-last-tile path (400 = 3*128 + 16).
    cases = [
        ((8, 16), 2048),   # single full-width block
        ((8, 400), 128),   # grid of 4 tiles, masked ragged last tile
    ]

    ok = True
    for shape, tile_n in cases:
        key, k1, k2 = jax.random.split(key, 3)
        # strictly positive values so per-column sums are nonzero (matches the
        # reference module's implicit assumption)
        x = jax.random.uniform(k1, shape, dtype=jnp.float32, minval=0.1, maxval=1.0)
        t = jax.random.uniform(k2, shape, dtype=jnp.float32, minval=0.1, maxval=1.0)

        angle = csa(x, t, tile_n=tile_n)
        jax.block_until_ready(angle)

        ref = _csa_ref(x, t)
        if not jnp.allclose(angle, ref, atol=1e-5, rtol=1e-5):
            ok = False
            print("MISMATCH", shape, float(angle), float(ref))

    if ok:
        print("KERNEL_OK")
</pallas_src>

<mosaic_0001>
module attributes {stable_mosaic.version = 11 : i64} {
  func.func @_csa_kernel(%arg0: i32, %arg1: memref<8x16xf32, #tpu.memory_space<vmem>>, %arg2: memref<8x16xf32, #tpu.memory_space<vmem>>, %arg3: memref<1x1xf32, #tpu.memory_space<smem>>, %arg4: memref<1x16xf32, #tpu.memory_space<vmem>>) attributes {dimension_semantics = [#tpu.dimension_semantics<arbitrary>], iteration_bounds = array<i64: 1>, scalar_prefetch = 0 : i64, scratch_operands = 1 : i64, tpu.core_type = #tpu.core_type<tc>, window_params = [{transform_indices = @transform_0, window_bounds = array<i64: 8, 16>}, {transform_indices = @transform_1, window_bounds = array<i64: 8, 16>}, {transform_indices = @transform_2, window_bounds = array<i64: 1, 1>}]} {
    %c0_i32 = arith.constant 0 : i32
    %0 = arith.cmpi eq, %arg0, %c0_i32 : i32
    %1 = arith.extui %0 : i1 to i32
    %c0_i32_0 = arith.constant 0 : i32
    %2 = arith.cmpi ne, %1, %c0_i32_0 : i32
    scf.if %2 {
      %cst_12 = arith.constant 0.000000e+00 : f32
      %20 = vector.broadcast %cst_12 : f32 to vector<1x16xf32>
      %c0_13 = arith.constant 0 : index
      %c0_14 = arith.constant 0 : index
      %21 = vector.load %arg4[%c0_13, %c0_14] : memref<1x16xf32, #tpu.memory_space<vmem>>, vector<1x16xf32>
      tpu.vector_store %arg4[%c0_13, %c0_14], %20 {strides = array<i32>} : memref<1x16xf32, #tpu.memory_space<vmem>>, vector<1x16xf32>,
    } else {
    }
    %c0 = arith.constant 0 : index
    %c0_1 = arith.constant 0 : index
    %3 = vector.load %arg1[%c0, %c0_1] : memref<8x16xf32, #tpu.memory_space<vmem>>, vector<8x16xf32>
    %c0_2 = arith.constant 0 : index
    %c0_3 = arith.constant 0 : index
    %4 = vector.load %arg2[%c0_2, %c0_3] : memref<8x16xf32, #tpu.memory_space<vmem>>, vector<8x16xf32>
    %cst = arith.constant dense<0.000000e+00> : vector<16xf32>
    %5 = vector.multi_reduction <add>, %3, %cst [0] : vector<8x16xf32> to vector<16xf32>
    %6 = vector.shape_cast %5 : vector<16xf32> to vector<1x16xf32>
    %cst_4 = arith.constant dense<0.000000e+00> : vector<16xf32>
    %7 = vector.multi_reduction <add>, %4, %cst_4 [0] : vector<8x16xf32> to vector<16xf32>
    %8 = vector.shape_cast %7 : vector<16xf32> to vector<1x16xf32>
    %9 = arith.mulf %3, %4 : vector<8x16xf32>
    %cst_5 = arith.constant dense<0.000000e+00> : vector<16xf32>
    %10 = vector.multi_reduction <add>, %9, %cst_5 [0] : vector<8x16xf32> to vector<16xf32>
    %11 = vector.shape_cast %10 : vector<16xf32> to vector<1x16xf32>
    %12 = arith.mulf %6, %8 : vector<1x16xf32>
    %c0_6 = arith.constant 0 : index
    %c0_7 = arith.constant 0 : index
    %13 = vector.load %arg4[%c0_6, %c0_7] : memref<1x16xf32, #tpu.memory_space<vmem>>, vector<1x16xf32>
    %14 = arith.divf %11, %12 : vector<1x16xf32>
    %15 = arith.addf %13, %14 : vector<1x16xf32>
    %c0_8 = arith.constant 0 : index
    %c0_9 = arith.constant 0 : index
    %16 = vector.load %arg4[%c0_8, %c0_9] : memref<1x16xf32, #tpu.memory_space<vmem>>, vector<1x16xf32>
    tpu.vector_store %arg4[%c0_8, %c0_9], %15 {strides = array<i32>} : memref<1x16xf32, #tpu.memory_space<vmem>>, vector<1x16xf32>,
    %c0_i32_10 = arith.constant 0 : i32
    %17 = arith.cmpi eq, %arg0, %c0_i32_10 : i32
    %18 = arith.extui %17 : i1 to i32
    %c0_i32_11 = arith.constant 0 : i32
    %19 = arith.cmpi ne, %18, %c0_i32_11 : i32
    scf.if %19 {
      %c0_12 = arith.constant 0 : index
      %c0_13 = arith.constant 0 : index
      %20 = vector.load %arg4[%c0_12, %c0_13] : memref<1x16xf32, #tpu.memory_space<vmem>>, vector<1x16xf32>
      %21 = vector.shape_cast %20 : vector<1x16xf32> to vector<1x1x16xf32>
      %cst_14 = arith.constant dense<0.000000e+00> : vector<1xf32>
      %22 = vector.multi_reduction <add>, %21, %cst_14 [1, 2] : vector<1x1x16xf32> to vector<1xf32>
      %23 = vector.shape_cast %22 : vector<1xf32> to vector<1x1x1xf32>
      %24 = vector.extract %23[0, 0, 0] : f32 from vector<1x1x1xf32>
      %cst_15 = arith.constant 1.000000e+00 : f32
      %25 = arith.subf %cst_15, %24 : f32
      %c0_16 = arith.constant 0 : index
      %c0_17 = arith.constant 0 : index
      %26 = memref.load %arg3[%c0_16, %c0_17] : memref<1x1xf32, #tpu.memory_space<smem>>
      memref.store %25, %arg3[%c0_16, %c0_17] : memref<1x1xf32, #tpu.memory_space<smem>>
    } else {
    }
    return
  }
  func.func @transform_0(%arg0: i32) -> (i32, i32) {
    %c0_i32 = arith.constant 0 : i32
    %c0_i32_0 = arith.constant 0 : i32
    return %c0_i32, %arg0 : i32, i32
  }
  func.func @transform_1(%arg0: i32) -> (i32, i32) {
    %c0_i32 = arith.constant 0 : i32
    %c0_i32_0 = arith.constant 0 : i32
    return %c0_i32, %arg0 : i32, i32
  }
  func.func @transform_2(%arg0: i32) -> (i32, i32) {
    %c0_i32 = arith.constant 0 : i32
    %c0_i32_0 = arith.constant 0 : i32
    %c0_i32_1 = arith.constant 0 : i32
    return %c0_i32, %c0_i32_0 : i32, i32
  }
}

</mosaic_0001>

<llo_original>
// kernel: tpu_custom_call.1
$region0: #{tpu_custom_call.1}
  #allocation0 [shape = 'u32[]', space=smem, size = 0x4, offset = 0x4, fixed_abs, tag = 'smem constant byte address 0x4 - core index']
  #allocation1 [shape = 'u32[144,128]{1,0:T(1,128)}', space=vmem, size = 0x12000, scoped, tag = 'internal scratch']
  #allocation2 [shape = 'f32[1,16]{1,0:T(1,128)}', space=vmem, size = 0x200, scoped, tag = 'scratch operand']
  %s0 = inlined_call_operand.hbm [shape: f32[8,16], index: 0, kind: input, shape index: {}]
  %s1 = inlined_call_operand.hbm [shape: f32[8,16], index: 1, kind: input, shape index: {}]
  %s2 = inlined_call_operand.hbm [shape: f32[1,1], index: 2, kind: output, shape index: {}]
  %s3 = sld [smem:[#allocation0]]
  $region34: #{tpu_custom_call.1} parent=0
    _
  %s5 = ssub.s32 1, %s3
  %s6 = scalar_select 0, %s5, %s3
  $region1: #{tpu_custom_call.1} parent=0
    #allocation3 [shape = 'u8[4096]{0}', space=vmem, size = 0x1000, scoped, tag = 'input window, operand 0, single buffered']
    #allocation4 [shape = 's32[1]{0}', space=sflag, size = 0x4, scoped, tag = 'scoped memory for tpu_custom_call.1']
    #allocation5 [shape = 's32[1]{0}', space=sflag, size = 0x4, scoped, tag = 'scoped memory for tpu_custom_call.1']
    #allocation6 [shape = 'u8[4096]{0}', space=vmem, size = 0x1000, scoped, tag = 'input window, operand 1, single buffered']
    #allocation7 [shape = 's32[1]{0}', space=sflag, size = 0x4, scoped, tag = 'scoped memory for tpu_custom_call.1']
    #allocation8 [shape = 'u8[512]{0}', space=smem, size = 0x200, scoped, tag = 'output window, operand 0, single buffered']
    %7 = vsyncpa [#allocation4], 0
    %8 = vsyncpa [#allocation7], 0
    %9 = vsyncpa [#allocation5], 0
    // Predicated region
    $region2: #{tpu_custom_call.1} parent=1 // pred_check
      _
    $region3: #{tpu_custom_call.1} parent=1 // pred_check_branch
      %11 = sbr.rel (0) target = $region5
    $region4: #{tpu_custom_call.1} parent=1 // pred_region
      %s13 = ssub.s32 128, 128
      %14 = vsyncadd [#allocation4], %s13
      %s16 = sshll.u32 [#allocation3], 4
      %s17 = int_to_ptr.vmem [resolvable:$true] %s16
      %19 = dma.hbm_to_vmem [thread:$0]  %s0, 128, %s17, [#allocation4]
    $region5: #{tpu_custom_call.1} parent=1 // pred_fallthru
      _
    // Predicated region
    $region6: #{tpu_custom_call.1} parent=1 // pred_check
      _
    $region7: #{tpu_custom_call.1} parent=1 // pred_check_branch
      %21 = sbr.rel (0) target = $region9
    $region8: #{tpu_custom_call.1} parent=1 // pred_region
      %s23 = ssub.s32 128, 128
      %24 = vsyncadd [#allocation7], %s23
      %s26 = sshll.u32 [#allocation6], 4
      %s27 = int_to_ptr.vmem [resolvable:$true] %s26
      %29 = dma.hbm_to_vmem [thread:$0]  %s1, 128, %s27, [#allocation7]
    $region9: #{tpu_custom_call.1} parent=1 // pred_fallthru
      _
    // Predicated region
    $region10: #{tpu_custom_call.1} parent=1 // pred_check
      _
    $region11: #{tpu_custom_call.1} parent=1 // pred_check_branch
      %31 = sbr.rel (0) target = $region13
    $region12: #{tpu_custom_call.1} parent=1 // pred_region
      %32 = dma.done [#allocation4], 128
    $region13: #{tpu_custom_call.1} parent=1 // pred_fallthru
      _
    // Predicated region
    $region14: #{tpu_custom_call.1} parent=1 // pred_check
      _
    $region15: #{tpu_custom_call.1} parent=1 // pred_check_branch
      %34 = sbr.rel (0) target = $region17
    $region16: #{tpu_custom_call.1} parent=1 // pred_region
      %35 = dma.done [#allocation7], 128
    $region17: #{tpu_custom_call.1} parent=1 // pred_fallthru
      _
    %p36 = scmp.eq.s32.totalorder 0, 0
    // Predicated region
    $region18: #{tpu_custom_call.1} parent=1 // pred_check
      %p37 = pneg %p36
    $region19: #{tpu_custom_call.1} parent=1 // pred_check_branch
      %39 = sbr.rel (%p37) target = $region21
    $region20: #{tpu_custom_call.1} parent=1 // pred_region
      %vm40 = vcmask 122880
      %41 = vst.msk [vmem:[#allocation2] sm:$0x1] %vm40, 0.0
    $region21: #{tpu_custom_call.1} parent=1 // pred_fallthru
      _
    %v42 = vld [vmem:[#allocation3] sm:$0xff]
    %v43 = vld [vmem:[#allocation6] sm:$0xff]
    %vm44 = vcmask 130048
    %v45 = vsel %vm44, %v42, 0.0
    %v46 = vrot.slane %v45, 4
    %v47 = vadd.f32 %v45, %v46
    %v48 = vrot.slane %v47, 2
    %v49 = vadd.f32 %v47, %v48
    %v50 = vrot.slane %v49, 1
    %v51 = vadd.f32 %v49, %v50
    %v52 = vsel %vm44, %v43, 0.0
    %v53 = vrot.slane %v52, 4
    %v54 = vadd.f32 %v52, %v53
    %v55 = vrot.slane %v54, 2
    %v56 = vadd.f32 %v54, %v55
    %v57 = vrot.slane %v56, 1
    %v58 = vadd.f32 %v56, %v57
    %v59 = vmul.f32 %v42, %v43
    %v60 = vsel %vm44, %v59, 0.0
    %v61 = vrot.slane %v60, 4
    %v62 = vadd.f32 %v60, %v61
    %v63 = vrot.slane %v62, 2
    %v64 = vadd.f32 %v62, %v63
    %v65 = vrot.slane %v64, 1
    %v66 = vadd.f32 %v64, %v65
    %v67 = vmul.f32 %v51, %v58
    %v68 = vld [vmem:[#allocation2] sm:$0x1]
    %v69 = vrcp.pop %v67
    %v70 = vmul.f32 %v66, %v69
    %v71 = vadd.f32 %v68, %v70
    %vm72 = vcmask 122880
    %73 = vst.msk [vmem:[#allocation2] sm:$0x1] %vm72, %v71
    // Predicated region
    $region22: #{tpu_custom_call.1} parent=1 // pred_check
      %p74 = pneg %p36
    $region23: #{tpu_custom_call.1} parent=1 // pred_check_branch
      %76 = sbr.rel (%p74) target = $region25
    $region24: #{tpu_custom_call.1} parent=1 // pred_region
      %v77 = vld [vmem:[#allocation2] sm:$0x1]
      %v78 = vsel %vm72, %v77, 0.0
      %79 = vadd.xlane.f32.xlu0 %v78
      %v80 = vpop.xlane.xlu0 %79
      %v81 = vrot.slane %v80, 4
      %v82 = vadd.f32 %v80, %v81
      %v83 = vrot.slane %v82, 2
      %v84 = vadd.f32 %v82, %v83
      %v85 = vrot.slane %v84, 1
      %v86 = vadd.f32 %v84, %v85
      %s87 = vtos %v86
      %s88 = ssub.f32 1.0, %s87
      %s89 = scalar_lea.smem [#allocation8], 0
      %90 = sst [smem:[%s89]] %s88
    $region25: #{tpu_custom_call.1} parent=1 // pred_fallthru
      _
    // Predicated region
    $region26: #{tpu_custom_call.1} parent=1 // pred_check
      _
    $region27: #{tpu_custom_call.1} parent=1 // pred_check_branch
      %92 = sbr.rel (0) target = $region29
    $region28: #{tpu_custom_call.1} parent=1 // pred_region
      %s94 = ssub.s32 16, 16
      %95 = vsyncadd [#allocation5], %s94
      %98 = dma.smem_to_hbm [#allocation8], 16, %s2, [#allocation5]
    $region29: #{tpu_custom_call.1} parent=1 // pred_fallthru
      _
    // Predicated region
    $region30: #{tpu_custom_call.1} parent=1 // pred_check
      _
    $region31: #{tpu_custom_call.1} parent=1 // pred_check_branch
      %100 = sbr.rel (0) target = $region33
    $region32: #{tpu_custom_call.1} parent=1 // pred_region
      %101 = dma.done [#allocation5], 16
    $region33: #{tpu_custom_call.1} parent=1 // pred_fallthru
      _
    %102 = sfence
    %103 = vsyncpa [#allocation4], 1
    %104 = vsyncpa [#allocation7], 1
    %105 = vsyncpa [#allocation5], 1

</llo_original>
